<compile_context>
chip_gen: v5e
topology: v5e:2x2
jax: 0.10.0
libtpu: 0.0.40
codegen_flags: <defaults>
</compile_context>

<pallas_src>
import numpy as np
import jax
import jax.numpy as jnp
from jax.experimental import pallas as pl
from jax.experimental.pallas import tpu as pltpu


# ----------------------------------------------------------------------------
# PE buffer (same math as the PyTorch __init__)
# ----------------------------------------------------------------------------
def make_positional_encoding(d_model: int, max_len: int = 500) -> jnp.ndarray:
    """Returns pe of shape (max_len, 1, d_model) == pe.unsqueeze(0).transpose(0,1)."""
    position = jnp.arange(0, max_len, dtype=jnp.float32)[:, None]           # (max_len, 1)
    div_term = jnp.exp(
        jnp.arange(0, d_model, 2, dtype=jnp.float32) * (-np.log(10000.0) / d_model)
    )                                                                        # (d_model/2,)
    pe = jnp.zeros((max_len, d_model), dtype=jnp.float32)
    pe = pe.at[:, 0::2].set(jnp.sin(position * div_term))
    pe = pe.at[:, 1::2].set(jnp.cos(position * div_term))
    return pe[:, None, :]                                                    # (max_len, 1, d_model)


# ----------------------------------------------------------------------------
# Kernels (pure elementwise; f32 math, cast on store)
# ----------------------------------------------------------------------------
def _add_pe_kernel_seq_first(x_ref, pe_ref, o_ref):
    # x: (ts, B, D), pe: (ts, D) — broadcast over batch (sublane broadcast).
    y = x_ref[...].astype(jnp.float32) + pe_ref[...][:, None, :]
    o_ref[...] = y.astype(o_ref.dtype)


def _add_pe_dropout_kernel_seq_first(x_ref, pe_ref, m_ref, o_ref):
    y = x_ref[...].astype(jnp.float32) + pe_ref[...][:, None, :]
    o_ref[...] = (y * m_ref[...].astype(jnp.float32)).astype(o_ref.dtype)


def _add_pe_kernel_batch_first(x_ref, pe_ref, o_ref):
    # x: (B, ts, D), pe: (ts, D) — broadcast over leading batch dim.
    y = x_ref[...].astype(jnp.float32) + pe_ref[...][None, :, :]
    o_ref[...] = y.astype(o_ref.dtype)


def _add_pe_dropout_kernel_batch_first(x_ref, pe_ref, m_ref, o_ref):
    y = x_ref[...].astype(jnp.float32) + pe_ref[...][None, :, :]
    o_ref[...] = (y * m_ref[...].astype(jnp.float32)).astype(o_ref.dtype)


# ----------------------------------------------------------------------------
# Tiling: byte-targeted sequence tile
# ----------------------------------------------------------------------------
_TARGET_TILE_BYTES = 2 * 1024 * 1024   # ~2 MiB of padded VMEM per x-tile buffer
_VMEM_LIMIT_BYTES = 32 * 1024 * 1024   # safe headroom on v5e/v6e (128 MiB) and v7x (64 MiB)


def _round_up(a: int, b: int) -> int:
    return ((a + b - 1) // b) * b


def _choose_seq_tile(S: int, B: int, D: int, itemsize: int, batch_first: bool) -> int:
    """Pick the sequence tile so one x tile occupies ~_TARGET_TILE_BYTES of VMEM.

    Bytes are counted after padding the trailing two block dims to (8, 128)
    vreg granularity (that is what actually occupies VMEM).
    """
    if batch_first:   # block (B, ts, D): trailing dims (ts, D); ts kept a multiple of 8
        row_bytes = B * _round_up(D, 128) * itemsize
    else:             # block (ts, B, D): trailing dims (B, D)
        row_bytes = _round_up(B, 8) * _round_up(D, 128) * itemsize
    ts = int(min(max(1, _TARGET_TILE_BYTES // row_bytes), S))
    if ts < S:
        # keep sublane alignment for partial-seq blocks (required when the
        # sequence axis is the second-to-last block dim in batch_first mode)
        ts = max(8, (ts // 8) * 8)
    return ts


# ----------------------------------------------------------------------------
# Forward
# ----------------------------------------------------------------------------
def positional_encoding_forward(
    x: jnp.ndarray,
    pe: jnp.ndarray,
    *,
    dropout_p: float = 0.1,
    training: bool = False,
    seed: int = 0,
    batch_first: bool = False,
) -> jnp.ndarray:
    """Pallas-backed forward pass of PositionalEncoding.

    x : (S, B, D) if batch_first=False, else (B, S, D)
    pe: (max_len, 1, D) buffer from make_positional_encoding.
    """
    if batch_first:
        B, S, D = x.shape
    else:
        S, B, D = x.shape

    pe_2d = pe[:S, 0, :].astype(jnp.float32)      # (S, D), small, f32 for accuracy

    itemsize = jnp.dtype(x.dtype).itemsize
    ts = _choose_seq_tile(S, B, D, itemsize, batch_first)
    grid = (pl.cdiv(S, ts),)

    pe_spec = pl.BlockSpec((ts, D), lambda i: (i, 0))
    if batch_first:
        x_spec = pl.BlockSpec((B, ts, D), lambda i: (0, i, 0))
    else:
        x_spec = pl.BlockSpec((ts, B, D), lambda i: (i, 0, 0))

    use_dropout = bool(training) and float(dropout_p) > 0.0

    if use_dropout:
        # Inverted dropout: mask values are {0, 1/(1-p)}; one multiply in-kernel.
        # TODO(synk): PyTorch's dropout RNG stream cannot be reproduced bit-exactly;
        # the jax.random stream is used instead (same keep-prob / scaling semantics).
        keep = jax.random.bernoulli(
            jax.random.PRNGKey(seed), p=1.0 - float(dropout_p), shape=x.shape)
        mask = (keep.astype(jnp.float32)
                * jnp.float32(1.0 / (1.0 - float(dropout_p)))).astype(x.dtype)
        kernel = (_add_pe_dropout_kernel_batch_first if batch_first
                  else _add_pe_dropout_kernel_seq_first)
        in_specs = [x_spec, pe_spec, x_spec]
        operands = (x, pe_2d, mask)
    else:
        # Eval / p == 0: add-only kernel (no mask traffic).  In production this
        # path could also bypass Pallas entirely and let XLA fuse the add.
        kernel = (_add_pe_kernel_batch_first if batch_first
                  else _add_pe_kernel_seq_first)
        in_specs = [x_spec, pe_spec]
        operands = (x, pe_2d)

    return pl.pallas_call(
        kernel,
        out_shape=jax.ShapeDtypeStruct(x.shape, x.dtype),
        grid=grid,
        in_specs=in_specs,
        out_specs=x_spec,
        compiler_params=pltpu.CompilerParams(
            dimension_semantics=("parallel",),
            vmem_limit_bytes=_VMEM_LIMIT_BYTES,
        ),
    )(*operands)


# ----------------------------------------------------------------------------
# Demo / self-test
# ----------------------------------------------------------------------------
if __name__ == "__main__":
    # Small shapes consistent with the module: seq=8, batch=2, d_model=32.
    S, B, D = 8, 2, 32
    max_len = 500
    dropout_p = 0.1

    key = jax.random.PRNGKey(0)
    x = jax.random.normal(key, (S, B, D), dtype=jnp.float32)

    pe = make_positional_encoding(D, max_len)
    ref = x + pe[:S]                                   # reference (eval-mode) output

    # ---- eval mode (dropout = identity), seq-first ----
    out_eval = positional_encoding_forward(x, pe, dropout_p=dropout_p, training=False)
    out_eval = jax.block_until_ready(out_eval)
    np.testing.assert_allclose(np.asarray(out_eval), np.asarray(ref), rtol=1e-6, atol=1e-6)

    # ---- eval mode, batch_first (handled in-kernel, no transposes) ----
    xb = jnp.transpose(x, (1, 0, 2))                   # build the (B, S, D) input
    out_bf = positional_encoding_forward(
        xb, pe, dropout_p=dropout_p, training=False, batch_first=True)
    out_bf = jax.block_until_ready(out_bf)
    np.testing.assert_allclose(
        np.asarray(out_bf), np.asarray(jnp.transpose(ref, (1, 0, 2))),
        rtol=1e-6, atol=1e-6)

    # ---- training mode: inverted dropout applied in-kernel ----
    out_train = positional_encoding_forward(
        x, pe, dropout_p=dropout_p, training=True, seed=1234)
    out_train = jax.block_until_ready(out_train)
    o = np.asarray(out_train)
    r = np.asarray(ref)
    # every element is either dropped (0) or the reference scaled by 1/(1-p)
    ok = np.isclose(o, 0.0, atol=1e-6) | np.isclose(o, r / (1.0 - dropout_p),
                                                    rtol=1e-5, atol=1e-5)
    assert ok.all(), "training-mode dropout output malformed"

    print("KERNEL_OK")
</pallas_src>

<mosaic_0001>
module attributes {stable_mosaic.version = 11 : i64} {
  func.func @_add_pe_kernel_seq_first(%arg0: i32, %arg1: memref<8x2x32xf32, #tpu.memory_space<vmem>>, %arg2: memref<8x32xf32, #tpu.memory_space<vmem>>, %arg3: memref<8x2x32xf32, #tpu.memory_space<vmem>>) attributes {dimension_semantics = [#tpu.dimension_semantics<parallel>], iteration_bounds = array<i64: 1>, scalar_prefetch = 0 : i64, scratch_operands = 0 : i64, tpu.core_type = #tpu.core_type<tc>, window_params = [{transform_indices = @transform_0, window_bounds = array<i64: 8, 2, 32>}, {transform_indices = @transform_1, window_bounds = array<i64: 8, 32>}, {transform_indices = @transform_2, window_bounds = array<i64: 8, 2, 32>}]} {
    %c0 = arith.constant 0 : index
    %c0_0 = arith.constant 0 : index
    %c0_1 = arith.constant 0 : index
    %0 = vector.load %arg1[%c0, %c0_0, %c0_1] : memref<8x2x32xf32, #tpu.memory_space<vmem>>, vector<8x2x32xf32>
    %c0_2 = arith.constant 0 : index
    %c0_3 = arith.constant 0 : index
    %1 = vector.load %arg2[%c0_2, %c0_3] : memref<8x32xf32, #tpu.memory_space<vmem>>, vector<8x32xf32>
    %2 = vector.shape_cast %1 : vector<8x32xf32> to vector<8x1x32xf32>
    %3 = vector.broadcast %2 : vector<8x1x32xf32> to vector<8x2x32xf32>
    %4 = arith.addf %0, %3 : vector<8x2x32xf32>
    %c0_4 = arith.constant 0 : index
    %c0_5 = arith.constant 0 : index
    %c0_6 = arith.constant 0 : index
    %5 = vector.load %arg3[%c0_4, %c0_5, %c0_6] : memref<8x2x32xf32, #tpu.memory_space<vmem>>, vector<8x2x32xf32>
    tpu.vector_store %arg3[%c0_4, %c0_5, %c0_6], %4 {strides = array<i32>} : memref<8x2x32xf32, #tpu.memory_space<vmem>>, vector<8x2x32xf32>,
    return
  }
  func.func @transform_0(%arg0: i32) -> (i32, i32, i32) {
    %c0_i32 = arith.constant 0 : i32
    %c0_i32_0 = arith.constant 0 : i32
    %c0_i32_1 = arith.constant 0 : i32
    return %arg0, %c0_i32, %c0_i32_0 : i32, i32, i32
  }
  func.func @transform_1(%arg0: i32) -> (i32, i32) {
    %c0_i32 = arith.constant 0 : i32
    %c0_i32_0 = arith.constant 0 : i32
    return %arg0, %c0_i32 : i32, i32
  }
  func.func @transform_2(%arg0: i32) -> (i32, i32, i32) {
    %c0_i32 = arith.constant 0 : i32
    %c0_i32_0 = arith.constant 0 : i32
    %c0_i32_1 = arith.constant 0 : i32
    return %arg0, %c0_i32, %c0_i32_0 : i32, i32, i32
  }
}

</mosaic_0001>

<llo_original>
// kernel: tpu_custom_call.1
$region0: #{tpu_custom_call.1}
  #allocation0 [shape = 'u32[]', space=smem, size = 0x4, offset = 0x4, fixed_abs, tag = 'smem constant byte address 0x4 - core index']
  #allocation1 [shape = 'u32[72,128]{1,0:T(1,128)}', space=vmem, size = 0x9000, scoped, tag = 'internal scratch']
  %s0 = inlined_call_operand.hbm [shape: f32[8,2,32], index: 0, kind: input, shape index: {}]
  %s1 = inlined_call_operand.hbm [shape: f32[8,32], index: 1, kind: input, shape index: {}]
  %s2 = inlined_call_operand.hbm [shape: f32[8,2,32], index: 2, kind: output, shape index: {}]
  %s3 = sld [smem:[#allocation0]]
  $region26: #{tpu_custom_call.1} parent=0
    _
  %s5 = ssub.s32 1, %s3
  %s6 = scalar_select 0, %s5, %s3
  $region1: #{tpu_custom_call.1} parent=0
    #allocation2 [shape = 'u8[8192]{0}', space=vmem, size = 0x2000, scoped, tag = 'input window, operand 0, single buffered']
    #allocation3 [shape = 's32[1]{0}', space=sflag, size = 0x4, scoped, tag = 'scoped memory for tpu_custom_call.1']
    #allocation4 [shape = 's32[1]{0}', space=sflag, size = 0x4, scoped, tag = 'scoped memory for tpu_custom_call.1']
    #allocation5 [shape = 'u8[4096]{0}', space=vmem, size = 0x1000, scoped, tag = 'input window, operand 1, single buffered']
    #allocation6 [shape = 's32[1]{0}', space=sflag, size = 0x4, scoped, tag = 'scoped memory for tpu_custom_call.1']
    #allocation7 [shape = 'u8[8192]{0}', space=vmem, size = 0x2000, scoped, tag = 'output window, operand 0, single buffered']
    %7 = vsyncpa [#allocation3], 0
    %8 = vsyncpa [#allocation6], 0
    %9 = vsyncpa [#allocation4], 0
    // Predicated region
    $region2: #{tpu_custom_call.1} parent=1 // pred_check
      _
    $region3: #{tpu_custom_call.1} parent=1 // pred_check_branch
      %11 = sbr.rel (0) target = $region5
    $region4: #{tpu_custom_call.1} parent=1 // pred_region
      %13 = vsyncadd [#allocation3], 0
      %s14 = sshll.u32 %s0, 4
      %s15 = int_to_ptr.hbm [resolvable:$true] %s14
      %s16 = sshll.u32 [#allocation2], 4
      %s17 = int_to_ptr.vmem [resolvable:$true] %s16
      %22 = dma.hbm_to_vmem [thread:$0]  %s15, 256, %s17, [#allocation3], 32, 32, 2
    $region5: #{tpu_custom_call.1} parent=1 // pred_fallthru
      _
    // Predicated region
    $region6: #{tpu_custom_call.1} parent=1 // pred_check
      _
    $region7: #{tpu_custom_call.1} parent=1 // pred_check_branch
      %24 = sbr.rel (0) target = $region9
    $region8: #{tpu_custom_call.1} parent=1 // pred_region
      %26 = vsyncadd [#allocation6], 0
      %s28 = sshll.u32 %s1, 4
      %s29 = int_to_ptr.hbm [resolvable:$true] %s28
      %s30 = sshll.u32 [#allocation5], 4
      %s31 = int_to_ptr.vmem [resolvable:$true] %s30
      %33 = dma.hbm_to_vmem [thread:$0]  %s29, 128, %s31, [#allocation6]
    $region9: #{tpu_custom_call.1} parent=1 // pred_fallthru
      _
    // Predicated region
    $region10: #{tpu_custom_call.1} parent=1 // pred_check
      _
    $region11: #{tpu_custom_call.1} parent=1 // pred_check_branch
      %35 = sbr.rel (0) target = $region13
    $region12: #{tpu_custom_call.1} parent=1 // pred_region
      %37 = dma.done [#allocation3], 256
    $region13: #{tpu_custom_call.1} parent=1 // pred_fallthru
      _
    // Predicated region
    $region14: #{tpu_custom_call.1} parent=1 // pred_check
      _
    $region15: #{tpu_custom_call.1} parent=1 // pred_check_branch
      %39 = sbr.rel (0) target = $region17
    $region16: #{tpu_custom_call.1} parent=1 // pred_region
      %41 = dma.done [#allocation6], 128
    $region17: #{tpu_custom_call.1} parent=1 // pred_fallthru
      _
    %v42 = vld [vmem:[#allocation2] sm:$0x3]
    %v43 = vld [vmem:[#allocation2 + $0x2] sm:$0x3]
    %v44 = vld [vmem:[#allocation2 + $0x4] sm:$0x3]
    %v45 = vld [vmem:[#allocation2 + $0x6] sm:$0x3]
    %v46 = vld [vmem:[#allocation2 + $0x8] sm:$0x3]
    %v47 = vld [vmem:[#allocation2 + $0xa] sm:$0x3]
    %v48 = vld [vmem:[#allocation2 + $0xc] sm:$0x3]
    %v49 = vld [vmem:[#allocation2 + $0xe] sm:$0x3]
    %v50 = vld [vmem:[#allocation5] sm:$0xff]
    %v52 = vrot.slane %v50, 1
    %v53 = vrot.slane %v50, 2
    %v54 = vrot.slane %v50, 3
    %v55 = vrot.slane %v50, 4
    %v56 = vrot.slane %v50, 5
    %v57 = vrot.slane %v50, 6
    %v58 = vrot.slane %v50, 7
    %v59 = vperm.slane %v50, 0
    %v60 = vperm.slane %v52, 0
    %v61 = vperm.slane %v53, 0
    %v62 = vperm.slane %v54, 0
    %v63 = vperm.slane %v55, 0
    %v64 = vperm.slane %v56, 0
    %v65 = vperm.slane %v57, 0
    %v66 = vperm.slane %v58, 0
    %v75 = vadd.f32 %v42, %v59
    %v76 = vadd.f32 %v43, %v60
    %v77 = vadd.f32 %v44, %v61
    %v78 = vadd.f32 %v45, %v62
    %v79 = vadd.f32 %v46, %v63
    %v80 = vadd.f32 %v47, %v64
    %v81 = vadd.f32 %v48, %v65
    %v82 = vadd.f32 %v49, %v66
    %vm83 = vcmask 254976
    %84 = vst.msk [vmem:[#allocation7] sm:$0x3] %vm83, %v75
    %85 = vst.msk [vmem:[#allocation7 + $0x2] sm:$0x3] %vm83, %v76
    %86 = vst.msk [vmem:[#allocation7 + $0x4] sm:$0x3] %vm83, %v77
    %87 = vst.msk [vmem:[#allocation7 + $0x6] sm:$0x3] %vm83, %v78
    %88 = vst.msk [vmem:[#allocation7 + $0x8] sm:$0x3] %vm83, %v79
    %89 = vst.msk [vmem:[#allocation7 + $0xa] sm:$0x3] %vm83, %v80
    %90 = vst.msk [vmem:[#allocation7 + $0xc] sm:$0x3] %vm83, %v81
    %91 = vst.msk [vmem:[#allocation7 + $0xe] sm:$0x3] %vm83, %v82
    // Predicated region
    $region18: #{tpu_custom_call.1} parent=1 // pred_check
      _
    $region19: #{tpu_custom_call.1} parent=1 // pred_check_branch
      %93 = sbr.rel (0) target = $region21
    $region20: #{tpu_custom_call.1} parent=1 // pred_region
      %95 = vsyncadd [#allocation4], 0
      %s96 = sshll.u32 [#allocation7], 4
      %s97 = int_to_ptr.vmem [resolvable:$true] %s96
      %s98 = sshll.u32 %s2, 4
      %s99 = int_to_ptr.hbm [resolvable:$true] %s98
      %104 = dma.vmem_to_hbm [thread:$0]  %s97, 256, %s99, [#allocation4], 32, 32, 2
    $region21: #{tpu_custom_call.1} parent=1 // pred_fallthru
      _
    // Predicated region
    $region22: #{tpu_custom_call.1} parent=1 // pred_check
      _
    $region23: #{tpu_custom_call.1} parent=1 // pred_check_branch
      %106 = sbr.rel (0) target = $region25
    $region24: #{tpu_custom_call.1} parent=1 // pred_region
      %108 = dma.done [#allocation4], 256
    $region25: #{tpu_custom_call.1} parent=1 // pred_fallthru
      _
    %109 = vsyncpa [#allocation3], 1
    %110 = vsyncpa [#allocation6], 1
    %111 = vsyncpa [#allocation4], 1

</llo_original>
